<compile_context>
chip_gen: v7x
topology: tpu7x:2x2x1
jax: 0.10.0
libtpu: 0.0.40
codegen_flags: <defaults>
</compile_context>

<pallas_src>
import functools

import jax
import jax.numpy as jnp
from jax import lax
from jax.experimental import pallas as pl
from jax.experimental.pallas import tpu as pltpu


def _wsce_kernel(x_ref, t_ref, wt_ref, w_ref, wsum_ref, out_ref, acc_ref, *,
                 n_true, n_classes, smoothing, steps, tile_n):
    """One (tile_n, C) tile of the streaming weighted smooth-CE reduction."""
    p = pl.program_id(0)          # batch part (parallel -> 2 TCs on v4/v5p/v7x)
    j = pl.program_id(1)          # tile within the part (reduction axis)

    @pl.when(j == 0)
    def _init():
        acc_ref[...] = jnp.zeros_like(acc_ref)

    x = x_ref[...].astype(jnp.float32)           # (T, C) logits (upcast if bf16)
    w = w_ref[...].astype(jnp.float32)           # (1, C) class weights
    w_sum = wsum_ref[0]                          # hoisted sum(w), SMEM scalar

    # numerically stable log-softmax pieces (row-wise)
    m = jnp.max(x, axis=1, keepdims=True)                        # (T, 1)
    z = x - m                                                    # (T, C)
    lse = jnp.log(jnp.sum(jnp.exp(z), axis=1, keepdims=True))    # (T, 1)

    # smoothing term: (s/C) * (sum_C(w*z) - lse*sum(w)); pure f32 VPU+XLU.
    row_wz = jnp.sum(z * w, axis=1, keepdims=True)               # (T, 1)
    smooth = (smoothing / n_classes) * (row_wz - lse * w_sum)    # (T, 1)

    # one-hot term: (1-s) * w[t] * (z[t] - lse); w[t] pre-gathered in wrapper.
    t = t_ref[...]                                               # (T, 1) int32
    col = lax.broadcasted_iota(jnp.int32, (tile_n, n_classes), 1)
    z_at_t = jnp.sum(jnp.where(col == t, z, 0.0), axis=1, keepdims=True)
    one_hot = (1.0 - smoothing) * wt_ref[...].astype(jnp.float32) * (z_at_t - lse)

    per_row = one_hot + smooth                                   # (T, 1)

    # mask rows past the true batch size: inputs are NOT padded, so tail rows of
    # the last (or duplicated, clamped) block contain garbage; the select zeroes
    # any NaN/Inf before it can reach the accumulator.
    row0 = (p * steps + j) * tile_n
    row = row0 + lax.broadcasted_iota(jnp.int32, (tile_n, 1), 0)
    per_row = jnp.where(row < n_true, per_row, 0.0)

    acc_ref[...] += jnp.sum(per_row)

    # flush this part's partial sum once, at its last tile
    @pl.when(j == steps - 1)
    def _flush():
        out_ref[...] = acc_ref[...]


def _vmem_capacity_bytes():
    try:
        return int(pltpu.get_tpu_info().vmem_capacity_bytes)
    except Exception:
        return 64 * 1024 * 1024          # conservative (v7x per-core VMEM)


def _default_num_parts():
    # The 2-way grid split only pays off on chips with two TensorCores sharing
    # the grid (v4/v5p megacore, v7x); on single-core v5e/v6e it just adds an
    # extra accumulator flush, so default to 1 there.
    try:
        kind = jax.devices()[0].device_kind.lower()
    except Exception:
        return 1
    if any(tag in kind for tag in ("v4", "v5p", "7")):
        return 2
    return 1


def weighted_smooth_ce_loss(inputs, targets, class_weights, *,
                            smoothing=0.1, tile_n=None, num_parts=None):
    """inputs: (N, C) float32/bfloat16; targets: (N,) int; class_weights: (C,)."""
    n, c = inputs.shape
    itemsize = jnp.dtype(inputs.dtype).itemsize
    # dtype-native sublane tile: 8 rows (4-byte), 16 (2-byte), 32 (1-byte)
    mult = max(8, 32 // itemsize)

    # generation-aware scoped-VMEM limit: ~48 MiB on v7x (64 MiB physical/core),
    # ~96 MiB on v5e/v6e (128 MiB physical); always above v5e's 16 MiB default.
    vmem_cap = _vmem_capacity_bytes()
    vmem_limit = max(32 << 20, min((vmem_cap * 3) // 4, 100 << 20))

    if tile_n is None:
        # per tile row: double-buffered logits block + ~5 live (T, C) f32
        # temporaries (upcast, z, exp, select, w*z) + small (T, 1) vectors
        bytes_per_row = c * (2 * itemsize + 5 * 4) + 64
        tile_n = (vmem_limit // 2) // bytes_per_row
    tile_n = int(max(mult, (int(tile_n) // mult) * mult))
    tile_n = min(tile_n, 2048, -(-n // mult) * mult)

    if num_parts is None:
        num_parts = _default_num_parts()
    if n <= tile_n:
        num_parts = 1
    steps = pl.cdiv(n, tile_n * num_parts)         # tiles per part

    tgt = targets.astype(jnp.int32).reshape(n, 1)
    w_f32 = class_weights.astype(jnp.float32)
    w_at_t = w_f32[targets].reshape(n, 1)          # pre-gathered w[target] per row
    w_row = w_f32.reshape(1, c)
    w_sum = jnp.sum(w_f32).reshape(1)              # hoisted sum(w) -> SMEM

    # No jnp.pad of the logits: clamp block indices so every DMA'd block origin
    # stays in-bounds; the in-kernel row mask discards duplicated/garbage rows.
    last_block = pl.cdiv(n, tile_n) - 1

    def row_block(p, j):
        return (jnp.minimum(p * steps + j, last_block), 0)

    kernel = functools.partial(
        _wsce_kernel, n_true=n, n_classes=c, smoothing=float(smoothing),
        steps=steps, tile_n=tile_n)

    partials = pl.pallas_call(
        kernel,
        out_shape=jax.ShapeDtypeStruct((num_parts * 8, 1), jnp.float32),
        grid=(num_parts, steps),
        in_specs=[
            pl.BlockSpec((tile_n, c), row_block),                  # logits
            pl.BlockSpec((tile_n, 1), row_block),                  # targets
            pl.BlockSpec((tile_n, 1), row_block),                  # w[target]
            pl.BlockSpec((1, c), lambda p, j: (0, 0)),             # class weights
            pl.BlockSpec(memory_space=pltpu.MemorySpace.SMEM),     # sum(w)
        ],
        out_specs=pl.BlockSpec((8, 1), lambda p, j: (p, 0)),
        scratch_shapes=[pltpu.VMEM((8, 1), jnp.float32)],
        compiler_params=pltpu.CompilerParams(
            dimension_semantics=("parallel", "arbitrary"),
            vmem_limit_bytes=int(vmem_limit)),
    )(inputs, tgt, w_at_t, w_row, w_sum)

    # each part broadcast its partial across its 8-row output block; finalize
    # with the negate and the division by the TRUE batch size.
    return -jnp.sum(partials[::8, 0]) / n


def _reference(inputs, targets, class_weights, smoothing=0.1):
    n, c = inputs.shape
    x = inputs.astype(jnp.float32)
    one_hot = jax.nn.one_hot(targets, c, dtype=jnp.float32)
    tgt = (1.0 - smoothing) * one_hot + smoothing / c
    tgt = tgt * class_weights.astype(jnp.float32)[None, :]
    logp = jax.nn.log_softmax(x, axis=1)
    return -jnp.mean(jnp.sum(logp * tgt, axis=1))


if __name__ == "__main__":
    key = jax.random.PRNGKey(0)

    # (N, C, dtype, forced tile_n, forced num_parts): cover single-tile,
    # ragged/masked batch, multi-tile 2-part accumulator path, and bf16 logits.
    cases = [
        (8, 32, jnp.float32, None, None),
        (10, 32, jnp.float32, None, None),     # N % 8 != 0 -> masked tail rows
        (6, 32, jnp.float32, None, None),      # N smaller than one sublane tile
        (24, 32, jnp.float32, 8, 2),           # 2 parts x 2 tiles + clamped block
        (16, 128, jnp.bfloat16, None, None),   # bf16 logits (halved HBM traffic)
    ]
    for idx, (N, C, dtype, tn, nparts) in enumerate(cases):
        k_x, k_t = jax.random.split(jax.random.fold_in(key, idx))
        x = jax.random.normal(k_x, (N, C), dtype=jnp.float32).astype(dtype)
        t = jax.random.randint(k_t, (N,), 0, C, dtype=jnp.int32)
        w = jnp.linspace(0.5, 1.5, C, dtype=jnp.float32)

        loss = weighted_smooth_ce_loss(x, t, w, tile_n=tn, num_parts=nparts)
        loss = jax.block_until_ready(loss)
        ref = _reference(x, t, w)
        assert jnp.allclose(loss, ref, atol=1e-5, rtol=1e-4), \
            (N, C, str(dtype), tn, nparts, float(loss), float(ref))

    print("KERNEL_OK")
</pallas_src>

<mosaic_0001>
module attributes {stable_mosaic.version = 11 : i64} {
  func.func @_wsce_kernel(%arg0: i32, %arg1: i32, %arg2: memref<8x32xf32, #tpu.memory_space<vmem>>, %arg3: memref<8x1xi32, #tpu.memory_space<vmem>>, %arg4: memref<8x1xf32, #tpu.memory_space<vmem>>, %arg5: memref<1x32xf32, #tpu.memory_space<vmem>>, %arg6: memref<1xf32, #tpu.memory_space<smem>>, %arg7: memref<8x1xf32, #tpu.memory_space<vmem>>, %arg8: memref<8x1xf32, #tpu.memory_space<vmem>>) attributes {dimension_semantics = [#tpu.dimension_semantics<parallel>, #tpu.dimension_semantics<arbitrary>], iteration_bounds = array<i64: 1, 1>, scalar_prefetch = 0 : i64, scratch_operands = 1 : i64, tpu.core_type = #tpu.core_type<tc>, window_params = [{transform_indices = @transform_0, window_bounds = array<i64: 8, 32>}, {transform_indices = @transform_1, window_bounds = array<i64: 8, 1>}, {transform_indices = @transform_2, window_bounds = array<i64: 8, 1>}, {pipeline_mode = #tpu.pipeline_mode<synchronous>, transform_indices = @transform_3, window_bounds = array<i64: 1, 32>}, {transform_indices = @transform_4, window_bounds = array<i64: 1>}, {transform_indices = @transform_5, window_bounds = array<i64: 8, 1>}]} {
    %c0_i32 = arith.constant 0 : i32
    %0 = arith.cmpi eq, %arg1, %c0_i32 : i32
    %1 = arith.extui %0 : i1 to i32
    %c0_i32_0 = arith.constant 0 : i32
    %2 = arith.cmpi ne, %1, %c0_i32_0 : i32
    scf.if %2 {
      %cst_24 = arith.constant 0.000000e+00 : f32
      %58 = vector.broadcast %cst_24 : f32 to vector<8x1xf32>
      %c0_25 = arith.constant 0 : index
      %c0_26 = arith.constant 0 : index
      %59 = vector.load %arg8[%c0_25, %c0_26] : memref<8x1xf32, #tpu.memory_space<vmem>>, vector<8x1xf32>
      tpu.vector_store %arg8[%c0_25, %c0_26], %58 {strides = array<i32>} : memref<8x1xf32, #tpu.memory_space<vmem>>, vector<8x1xf32>,
    } else {
    }
    %c0 = arith.constant 0 : index
    %c0_1 = arith.constant 0 : index
    %3 = vector.load %arg2[%c0, %c0_1] : memref<8x32xf32, #tpu.memory_space<vmem>>, vector<8x32xf32>
    %c0_2 = arith.constant 0 : index
    %c0_3 = arith.constant 0 : index
    %4 = vector.load %arg5[%c0_2, %c0_3] : memref<1x32xf32, #tpu.memory_space<vmem>>, vector<1x32xf32>
    %c0_4 = arith.constant 0 : index
    %5 = memref.load %arg6[%c0_4] : memref<1xf32, #tpu.memory_space<smem>>
    %cst = arith.constant dense<0xFF800000> : vector<8xf32>
    %6 = vector.multi_reduction <maximumf>, %3, %cst [1] : vector<8x32xf32> to vector<8xf32>
    %7 = vector.shape_cast %6 : vector<8xf32> to vector<8x1xf32>
    %8 = vector.broadcast %7 : vector<8x1xf32> to vector<8x32xf32>
    %9 = arith.subf %3, %8 : vector<8x32xf32>
    %10 = math.exp %9 : vector<8x32xf32>
    %cst_5 = arith.constant dense<0.000000e+00> : vector<8xf32>
    %11 = vector.multi_reduction <add>, %10, %cst_5 [1] : vector<8x32xf32> to vector<8xf32>
    %12 = vector.shape_cast %11 : vector<8xf32> to vector<8x1xf32>
    %13 = math.log %12 : vector<8x1xf32>
    %14 = vector.broadcast %4 : vector<1x32xf32> to vector<8x32xf32>
    %15 = arith.mulf %9, %14 : vector<8x32xf32>
    %cst_6 = arith.constant dense<0.000000e+00> : vector<8xf32>
    %16 = vector.multi_reduction <add>, %15, %cst_6 [1] : vector<8x32xf32> to vector<8xf32>
    %17 = vector.shape_cast %16 : vector<8xf32> to vector<8x1xf32>
    %18 = vector.broadcast %5 : f32 to vector<8x1xf32>
    %19 = arith.mulf %13, %18 : vector<8x1xf32>
    %20 = arith.subf %17, %19 : vector<8x1xf32>
    %cst_7 = arith.constant 3.125000e-03 : f32
    %21 = vector.broadcast %cst_7 : f32 to vector<8x1xf32>
    %22 = arith.mulf %21, %20 : vector<8x1xf32>
    %c0_8 = arith.constant 0 : index
    %c0_9 = arith.constant 0 : index
    %23 = vector.load %arg3[%c0_8, %c0_9] : memref<8x1xi32, #tpu.memory_space<vmem>>, vector<8x1xi32>
    %24 = tpu.iota {dimensions = array<i32: 1>} : vector<8x32xi32>
    %25 = vector.broadcast %23 : vector<8x1xi32> to vector<8x32xi32>
    %26 = arith.cmpi eq, %24, %25 : vector<8x32xi32>
    %cst_10 = arith.constant 0.000000e+00 : f32
    %27 = vector.broadcast %cst_10 : f32 to vector<8x32xf32>
    %28 = arith.select %26, %9, %27 : vector<8x32xi1>, vector<8x32xf32>
    %cst_11 = arith.constant dense<0.000000e+00> : vector<8xf32>
    %29 = vector.multi_reduction <add>, %28, %cst_11 [1] : vector<8x32xf32> to vector<8xf32>
    %30 = vector.shape_cast %29 : vector<8xf32> to vector<8x1xf32>
    %c0_12 = arith.constant 0 : index
    %c0_13 = arith.constant 0 : index
    %31 = vector.load %arg4[%c0_12, %c0_13] : memref<8x1xf32, #tpu.memory_space<vmem>>, vector<8x1xf32>
    %cst_14 = arith.constant 0.899999976 : f32
    %32 = vector.broadcast %cst_14 : f32 to vector<8x1xf32>
    %33 = arith.mulf %32, %31 : vector<8x1xf32>
    %34 = arith.subf %30, %13 : vector<8x1xf32>
    %35 = arith.mulf %33, %34 : vector<8x1xf32>
    %36 = arith.addf %35, %22 : vector<8x1xf32>
    %c1_i32 = arith.constant 1 : i32
    %37 = arith.muli %arg0, %c1_i32 : i32
    %38 = arith.addi %37, %arg1 : i32
    %c8_i32 = arith.constant 8 : i32
    %39 = arith.muli %38, %c8_i32 : i32
    %40 = tpu.iota {dimensions = array<i32: 0>} : vector<8x1xi32>
    %41 = vector.broadcast %39 : i32 to vector<8x1xi32>
    %42 = arith.addi %41, %40 : vector<8x1xi32>
    %c8_i32_15 = arith.constant 8 : i32
    %43 = vector.broadcast %c8_i32_15 : i32 to vector<8x1xi32>
    %44 = arith.cmpi slt, %42, %43 : vector<8x1xi32>
    %cst_16 = arith.constant 0.000000e+00 : f32
    %45 = vector.broadcast %cst_16 : f32 to vector<8x1xf32>
    %46 = arith.select %44, %36, %45 : vector<8x1xi1>, vector<8x1xf32>
    %c0_17 = arith.constant 0 : index
    %c0_18 = arith.constant 0 : index
    %47 = vector.load %arg8[%c0_17, %c0_18] : memref<8x1xf32, #tpu.memory_space<vmem>>, vector<8x1xf32>
    %48 = vector.shape_cast %46 : vector<8x1xf32> to vector<1x8x1xf32>
    %cst_19 = arith.constant dense<0.000000e+00> : vector<1xf32>
    %49 = vector.multi_reduction <add>, %48, %cst_19 [1, 2] : vector<1x8x1xf32> to vector<1xf32>
    %50 = vector.shape_cast %49 : vector<1xf32> to vector<1x1x1xf32>
    %51 = vector.extract %50[0, 0, 0] : f32 from vector<1x1x1xf32>
    %52 = vector.broadcast %51 : f32 to vector<8x1xf32>
    %53 = arith.addf %47, %52 : vector<8x1xf32>
    %c0_20 = arith.constant 0 : index
    %c0_21 = arith.constant 0 : index
    %54 = vector.load %arg8[%c0_20, %c0_21] : memref<8x1xf32, #tpu.memory_space<vmem>>, vector<8x1xf32>
    tpu.vector_store %arg8[%c0_20, %c0_21], %53 {strides = array<i32>} : memref<8x1xf32, #tpu.memory_space<vmem>>, vector<8x1xf32>,
    %c0_i32_22 = arith.constant 0 : i32
    %55 = arith.cmpi eq, %arg1, %c0_i32_22 : i32
    %56 = arith.extui %55 : i1 to i32
    %c0_i32_23 = arith.constant 0 : i32
    %57 = arith.cmpi ne, %56, %c0_i32_23 : i32
    scf.if %57 {
      %c0_24 = arith.constant 0 : index
      %c0_25 = arith.constant 0 : index
      %58 = vector.load %arg8[%c0_24, %c0_25] : memref<8x1xf32, #tpu.memory_space<vmem>>, vector<8x1xf32>
      %c0_26 = arith.constant 0 : index
      %c0_27 = arith.constant 0 : index
      %59 = vector.load %arg7[%c0_26, %c0_27] : memref<8x1xf32, #tpu.memory_space<vmem>>, vector<8x1xf32>
      tpu.vector_store %arg7[%c0_26, %c0_27], %58 {strides = array<i32>} : memref<8x1xf32, #tpu.memory_space<vmem>>, vector<8x1xf32>,
    } else {
    }
    return
  }
  func.func @transform_0(%arg0: i32, %arg1: i32) -> (i32, i32) {
    %c1_i32 = arith.constant 1 : i32
    %0 = arith.muli %arg0, %c1_i32 : i32
    %1 = arith.addi %0, %arg1 : i32
    %c0_i32 = arith.constant 0 : i32
    %2 = arith.minsi %1, %c0_i32 : i32
    %c0_i32_0 = arith.constant 0 : i32
    %c0_i32_1 = arith.constant 0 : i32
    return %2, %c0_i32_0 : i32, i32
  }
  func.func @transform_1(%arg0: i32, %arg1: i32) -> (i32, i32) {
    %c1_i32 = arith.constant 1 : i32
    %0 = arith.muli %arg0, %c1_i32 : i32
    %1 = arith.addi %0, %arg1 : i32
    %c0_i32 = arith.constant 0 : i32
    %2 = arith.minsi %1, %c0_i32 : i32
    %c0_i32_0 = arith.constant 0 : i32
    %c0_i32_1 = arith.constant 0 : i32
    return %2, %c0_i32_0 : i32, i32
  }
  func.func @transform_2(%arg0: i32, %arg1: i32) -> (i32, i32) {
    %c1_i32 = arith.constant 1 : i32
    %0 = arith.muli %arg0, %c1_i32 : i32
    %1 = arith.addi %0, %arg1 : i32
    %c0_i32 = arith.constant 0 : i32
    %2 = arith.minsi %1, %c0_i32 : i32
    %c0_i32_0 = arith.constant 0 : i32
    %c0_i32_1 = arith.constant 0 : i32
    return %2, %c0_i32_0 : i32, i32
  }
  func.func @transform_3(%arg0: i32, %arg1: i32) -> (i32, i32) {
    %c0_i32 = arith.constant 0 : i32
    %c0_i32_0 = arith.constant 0 : i32
    %c0_i32_1 = arith.constant 0 : i32
    return %c0_i32, %c0_i32_0 : i32, i32
  }
  func.func @transform_4(%arg0: i32, %arg1: i32) -> i32 {
    %c0_i32 = arith.constant 0 : i32
    %c0_i32_0 = arith.constant 0 : i32
    return %c0_i32 : i32
  }
  func.func @transform_5(%arg0: i32, %arg1: i32) -> (i32, i32) {
    %c0_i32 = arith.constant 0 : i32
    %c0_i32_0 = arith.constant 0 : i32
    return %arg0, %c0_i32 : i32, i32
  }
}

</mosaic_0001>

<llo_original>
// kernel: tpu_custom_call.1
$region0: #{tpu_custom_call.1}
  #allocation0 [shape = 'u32[]', space=smem, size = 0x4, offset = 0x4, fixed_abs, tag = 'smem constant byte address 0x4 - core index']
  #allocation1 [shape = 'u32[144,128]{1,0:T(1,128)}', space=vmem, size = 0x12000, scoped, tag = 'internal scratch']
  #allocation2 [shape = 'f32[8,1]{1,0:T(8,128)}', space=vmem, size = 0x1000, scoped, tag = 'scratch operand']
  #allocation3 [shape = 'f32[1]{0:T(128)S(6)}', space=smem, size = 0x200, scoped, tag = 'scoped memory for tpu_custom_call.1']
  %s0 = inlined_call_operand.vmem [shape: f32[8,32], index: 0, kind: input, shape index: {}]
  %s1 = inlined_call_operand.vmem [shape: s32[8,1], index: 1, kind: input, shape index: {}]
  %s2 = inlined_call_operand.vmem [shape: f32[8,1], index: 2, kind: input, shape index: {}]
  %s3 = inlined_call_operand.vmem [shape: f32[1,32], index: 3, kind: input, shape index: {}]
  %s4 = inlined_call_operand.<no memory space> [shape: f32[1], index: 4, kind: input, shape index: {}]
  %s5 = inlined_call_operand.vmem [shape: f32[8,1], index: 5, kind: output, shape index: {}]
  %s6 = sld [smem:[#allocation0]]
  $region38: #{tpu_custom_call.1} parent=0
    _
  %s8 = ssub.s32 1, %s6
  %s9 = scalar_select 0, %s8, %s6
  %10 = sst [smem:[#allocation3]] %s4
  // Predicated region
  $region2: #{tpu_custom_call.1} parent=0 // pred_check
    _
  $region3: #{tpu_custom_call.1} parent=0 // pred_check_branch
    %12 = sbr.rel (0) target = $region5
  $region4: #{tpu_custom_call.1} parent=0 // pred_region
    %s13 = sadd.s32 0, 0
    %p14 = scmp.lt.s32.totalorder %s13, 0
    %s15 = scalar_select %p14, %s13, 0
    %p16 = scmp.lt.s32.totalorder %s15, 0
    %s17 = scalar_select %p16, %s15, 0
    %s18 = smul.addr %s17, 8
    %s19 = scalar_lea.vmem %s0, %s18
    %s20 = sadd.s32 0, 0
    %p21 = scmp.lt.s32.totalorder %s20, 0
    %s22 = scalar_select %p21, %s20, 0
  $region5: #{tpu_custom_call.1} parent=0 // pred_fallthru
    _
  // Predicated region
  $region6: #{tpu_custom_call.1} parent=0 // pred_check
    _
  $region7: #{tpu_custom_call.1} parent=0 // pred_check_branch
    %24 = sbr.rel (0) target = $region9
  $region8: #{tpu_custom_call.1} parent=0 // pred_region
    %s25 = sadd.s32 0, 0
    %p26 = scmp.lt.s32.totalorder %s25, 0
    %s27 = scalar_select %p26, %s25, 0
    %p28 = scmp.lt.s32.totalorder %s27, 0
    %s29 = scalar_select %p28, %s27, 0
    %s30 = smul.addr %s29, 8
    %s31 = scalar_lea.vmem %s1, %s30
    %s32 = sadd.s32 0, 0
    %p33 = scmp.lt.s32.totalorder %s32, 0
    %s34 = scalar_select %p33, %s32, 0
  $region9: #{tpu_custom_call.1} parent=0 // pred_fallthru
    _
  // Predicated region
  $region10: #{tpu_custom_call.1} parent=0 // pred_check
    _
  $region11: #{tpu_custom_call.1} parent=0 // pred_check_branch
    %36 = sbr.rel (0) target = $region13
  $region12: #{tpu_custom_call.1} parent=0 // pred_region
    %s37 = sadd.s32 0, 0
    %p38 = scmp.lt.s32.totalorder %s37, 0
    %s39 = scalar_select %p38, %s37, 0
    %p40 = scmp.lt.s32.totalorder %s39, 0
    %s41 = scalar_select %p40, %s39, 0
    %s42 = smul.addr %s41, 8
    %s43 = scalar_lea.vmem %s2, %s42
    %s44 = sadd.s32 0, 0
    %p45 = scmp.lt.s32.totalorder %s44, 0
    %s46 = scalar_select %p45, %s44, 0
  $region13: #{tpu_custom_call.1} parent=0 // pred_fallthru
    _
  // Predicated region
  $region14: #{tpu_custom_call.1} parent=0 // pred_check
    _
  $region15: #{tpu_custom_call.1} parent=0 // pred_check_branch
    %48 = sbr.rel (0) target = $region17
  $region16: #{tpu_custom_call.1} parent=0 // pred_region
    _
  $region17: #{tpu_custom_call.1} parent=0 // pred_fallthru
    _
  // Predicated region
  $region18: #{tpu_custom_call.1} parent=0 // pred_check
    _
  $region19: #{tpu_custom_call.1} parent=0 // pred_check_branch
    %50 = sbr.rel (0) target = $region21
  $region20: #{tpu_custom_call.1} parent=0 // pred_region
    _
  $region21: #{tpu_custom_call.1} parent=0 // pred_fallthru
    _
  %s51 = sadd.s32 0, 0
  %p52 = scmp.lt.s32.totalorder %s51, 0
  %s53 = scalar_select %p52, %s51, 0
  %p54 = scmp.lt.s32.totalorder %s53, 0
  %s55 = scalar_select %p54, %s53, 0
  %s56 = smul.addr %s55, 8
  %s57 = scalar_lea.vmem %s0, %s56
  %s58 = sadd.s32 0, 0
  %p59 = scmp.lt.s32.totalorder %s58, 0
  %s60 = scalar_select %p59, %s58, 0
  %p61 = scmp.lt.s32.totalorder %s60, 0
  %s62 = scalar_select %p61, %s60, 0
  %s63 = smul.addr %s62, 8
  %s64 = scalar_lea.vmem %s1, %s63
  %s65 = sadd.s32 0, 0
  %p66 = scmp.lt.s32.totalorder %s65, 0
  %s67 = scalar_select %p66, %s65, 0
  %p68 = scmp.lt.s32.totalorder %s67, 0
  %s69 = scalar_select %p68, %s67, 0
  %s70 = smul.addr %s69, 8
  %s71 = scalar_lea.vmem %s2, %s70
  %s72 = sadd.s32 0, 0
  %p73 = scmp.lt.s32.totalorder %s72, 0
  %s74 = scalar_select %p73, %s72, 0
  %p75 = scmp.lt.s32.totalorder %s74, 0
  %s76 = scalar_select %p75, %s74, 0
  %s77 = smul.addr %s76, 8
  %s78 = scalar_lea.vmem %s0, %s77
  %s79 = sadd.s32 0, 0
  %p80 = scmp.lt.s32.totalorder %s79, 0
  %s81 = scalar_select %p80, %s79, 0
  %s82 = sadd.s32 0, 0
  %p83 = scmp.lt.s32.totalorder %s82, 0
  %s84 = scalar_select %p83, %s82, 0
  %p85 = scmp.lt.s32.totalorder %s84, 0
  %s86 = scalar_select %p85, %s84, 0
  %s87 = smul.addr %s86, 8
  %s88 = scalar_lea.vmem %s1, %s87
  %s89 = sadd.s32 0, 0
  %p90 = scmp.lt.s32.totalorder %s89, 0
  %s91 = scalar_select %p90, %s89, 0
  %s92 = sadd.s32 0, 0
  %p93 = scmp.lt.s32.totalorder %s92, 0
  %s94 = scalar_select %p93, %s92, 0
  %p95 = scmp.lt.s32.totalorder %s94, 0
  %s96 = scalar_select %p95, %s94, 0
  %s97 = smul.addr %s96, 8
  %s98 = scalar_lea.vmem %s2, %s97
  %s99 = sadd.s32 0, 0
  %p100 = scmp.lt.s32.totalorder %s99, 0
  %s101 = scalar_select %p100, %s99, 0
  %p102 = scmp.eq.s32.totalorder 0, 0
  // Predicated region
  $region22: #{tpu_custom_call.1} parent=0 // pred_check
    %p103 = pneg %p102
  $region23: #{tpu_custom_call.1} parent=0 // pred_check_branch
    %105 = sbr.rel (%p103) target = $region25
  $region24: #{tpu_custom_call.1} parent=0 // pred_region
    %vm106 = vcmask 7168
    %107 = vst.msk [vmem:[#allocation2] sm:$0xff] %vm106, 0.0
  $region25: #{tpu_custom_call.1} parent=0 // pred_fallthru
    _
  %v108 = vld [vmem:[%s78] sm:$0xff]
  %v109 = vld [vmem:[%s3] sm:$0x1]
  %s110 = sld [smem:[#allocation3]]
  %vm111 = vcmask 261120
  %v112 = vsel %vm111, %v108, -inf
  %113 = vmax.xlane.f32.xlu0 %v112
  %v114 = vpop.xlane.xlu0 %113
  %v115 = vsub.f32 %v108, %v114
  %v116 = vmul.f32 %v115, 1.442695
  %v117 = vpow.pop %v116
  %v118 = vsel %vm111, %v117, 0.0
  %119 = vadd.xlane.f32.xlu0 %v118
  %v120 = vpop.xlane.xlu0 %119
  %v121 = vlog2.pop %v120
  %v122 = vmul.f32 %v121, 0.6931472
  %v124 = vlaneseq
  %v125 = vshrl.u32 %v124, 7
  %v126 = vsub.s32 0, %v125
  %v127 = vrot.slane %v109, %v126
  %v129 = vmul.f32 %v115, %v127
  %v130 = vsel %vm111, %v129, 0.0
  %131 = vadd.xlane.f32.xlu0 %v130
  %v132 = vpop.xlane.xlu0 %131
  %v133 = vstv %s110
  %v134 = vmul.f32 %v122, %v133
  %v135 = vsub.f32 %v132, %v134
  %v136 = vmul.f32 %v135, 0.003125
  %v137 = vld [vmem:[%s88] sm:$0xff]
  %v138 = vlaneseq
  %v139 = vand.u32 %v138, 127
  %140 = vset.pattern.permute.xlu0 0
  %141 = vperm.xlu0 %140, %v137
  %v142 = vpop.permute.xlu0 %141
  %vm143 = vcmp.eq.s32.totalorder %v139, %v142
  %v144 = vsel %vm143, %v115, 0.0
  %v145 = vsel %vm111, %v144, 0.0
  %146 = vadd.xlane.f32.xlu0 %v145
  %v147 = vpop.xlane.xlu0 %146
  %v148 = vld [vmem:[%s98] sm:$0xff]
  %v149 = vmul.f32 %v148, 0.9
  %v150 = vsub.f32 %v147, %v122
  %v151 = vmul.f32 %v149, %v150
  %v152 = vadd.f32 %v151, %v136
  %s153 = sadd.s32 0, 0
  %s154 = smul.u32 %s153, 8
  %v155 = vlaneseq
  %v156 = vshrl.u32 %v155, 7
  %v157 = vstv %s154
  %v158 = vadd.s32 %v157, %v156
  %vm159 = vcmp.lt.s32.totalorder %v158, 8
  %v160 = vsel %vm159, %v152, 0.0
  %v161 = vld [vmem:[#allocation2] sm:$0xff]
  %vm162 = vcmask 7168
  %v163 = vsel %vm162, %v160, 0.0
  %164 = vadd.xlane.f32.xlu0 %v163
  %v165 = vpop.xlane.xlu0 %164
  %v166 = vrot.slane %v165, 4
  %v167 = vadd.f32 %v165, %v166
  %v168 = vrot.slane %v167, 2
  %v169 = vadd.f32 %v167, %v168
  %v170 = vrot.slane %v169, 1
  %v171 = vadd.f32 %v169, %v170
  %s172 = vtos %v171
  %v173 = vstv %s172
  %v174 = vadd.f32 %v161, %v173
  %175 = vst.msk [vmem:[#allocation2] sm:$0xff] %vm162, %v174
  // Predicated region
  $region26: #{tpu_custom_call.1} parent=0 // pred_check
    %p176 = pneg %p102
  $region27: #{tpu_custom_call.1} parent=0 // pred_check_branch
    %178 = sbr.rel (%p176) target = $region29
  $region28: #{tpu_custom_call.1} parent=0 // pred_region
    %v179 = vld [vmem:[#allocation2] sm:$0xff]
    %180 = vst.msk [vmem:[%s5] sm:$0xff] %vm162, %v179
  $region29: #{tpu_custom_call.1} parent=0 // pred_fallthru
    _
  // Predicated region
  $region30: #{tpu_custom_call.1} parent=0 // pred_check
    _
  $region31: #{tpu_custom_call.1} parent=0 // pred_check_branch
    %182 = sbr.rel (0) target = $region33
  $region32: #{tpu_custom_call.1} parent=0 // pred_region
    _
  $region33: #{tpu_custom_call.1} parent=0 // pred_fallthru
    _
  // Predicated region
  $region34: #{tpu_custom_call.1} parent=0 // pred_check
    _
  $region35: #{tpu_custom_call.1} parent=0 // pred_check_branch
    %184 = sbr.rel (0) target = $region37
  $region36: #{tpu_custom_call.1} parent=0 // pred_region
    _
  $region37: #{tpu_custom_call.1} parent=0 // pred_fallthru
    _

</llo_original>
